<compile_context>
chip_gen: v7x
topology: tpu7x:2x2x1
jax: 0.10.0
libtpu: 0.0.40
codegen_flags: <defaults>
</compile_context>

<pallas_src>
import math

import jax
import jax.numpy as jnp
from jax.experimental import pallas as pl
from jax.experimental.pallas import tpu as pltpu

_LANE = 128
_SUBLANE = 8
_MAX_TILE_ROWS = 16384


def _round_up(x, m):
    return ((x + m - 1) // m) * m


def _sublane_align(dtype):
    # Native sublane packing: f32 -> 8, bf16/f16 -> 16, 8-bit -> 32.
    return _SUBLANE * max(1, 4 // jnp.dtype(dtype).itemsize)


def _vmem_budget():
    """(per x-buffer byte budget, scoped-VMEM limit cap) for this generation."""
    per_buf, limit_cap = 4 << 20, 32 << 20          # safe for v7x (64 MiB VMEM/TC)
    try:
        cap = int(pltpu.get_tpu_info().vmem_capacity_bytes)
        if cap >= (100 << 20):                      # v5e / v6e: 128 MiB physical VMEM
            per_buf, limit_cap = 10 << 20, 64 << 20
    except Exception:
        pass
    return per_buf, limit_cap


def _pick_pack_factor(d, n_rows):
    """Rows packed per lane-row so small D still fills the 128-lane axis."""
    if d >= _LANE or n_rows < 2 * _SUBLANE:
        return 1
    if _LANE % d == 0:
        g = _LANE // d
    else:
        g = _LANE // math.gcd(d, _LANE)             # smallest g with g*d % 128 == 0
        if g > 32:
            g = max(1, _LANE // d)
    return max(1, min(g, n_rows // _SUBLANE))       # keep enough packed rows for a tile


def _pick_tile_rows(np_rows, packed_feat, dtype, per_buf_budget):
    """Largest packed-row tile admitted by the per-buffer VMEM byte budget."""
    itemsize = jnp.dtype(dtype).itemsize
    row_bytes = packed_feat * itemsize
    budget_rows = max(1, per_buf_budget // row_bytes)
    align = _LANE if (budget_rows >= _LANE and np_rows >= _LANE) else _sublane_align(dtype)
    tm = min(budget_rows, _MAX_TILE_ROWS, _round_up(np_rows, align))
    # Keep >= 2 tiles when there is enough work to split across v7x's two TCs.
    if np_rows * row_bytes >= (2 << 20):
        tm = min(tm, _round_up(-(-np_rows // 2), align))
    return max(align, (tm // align) * align)


def _frame_scoring_kernel(b_ref, x_ref, w_ref, o_ref):
    # b_ref : SMEM (1,)        bias scalar
    # x_ref : VMEM (tm, g*D)   g original rows packed per lane-row
    # w_ref : VMEM (g, g*D)    block-diagonal weight (segment j = w on cols j*D:(j+1)*D)
    # o_ref : VMEM (g, tm)     lane-dense scores; o[j, p] = score of packed row p, seg j
    x = x_ref[...].astype(jnp.float32)
    w = w_ref[...]
    # 'gk,tk->gt' on the otherwise-idle MXU (same pattern as q@k^T in flash attention):
    # no cross-lane reduction, no sublane->lane relayout, f32 accumulation.
    z = jax.lax.dot_general(
        w, x, dimension_numbers=(((1,), (1,)), ((), ())),
        preferred_element_type=jnp.float32)
    o_ref[...] = jax.nn.sigmoid(z + b_ref[0]).astype(o_ref.dtype)


def frame_scoring(x, weight, bias):
    """sigmoid(x @ weight.T + bias): x (B,S,D), weight (1,D), bias (1,) -> (B,S,1)."""
    B, S, D = x.shape
    N = B * S
    out_dtype = x.dtype
    itemsize = jnp.dtype(x.dtype).itemsize
    out_itemsize = jnp.dtype(out_dtype).itemsize

    # --- pack g rows per lane-row (free, contiguous reshape; small jnp.pad if ragged).
    g = _pick_pack_factor(D, N)
    n_pad = _round_up(N, g)
    x2 = x.reshape(N, D)
    if n_pad != N:
        x2 = jnp.pad(x2, ((0, n_pad - N), (0, 0)))
    np_rows = n_pad // g
    gd = g * D
    xp = x2.reshape(np_rows, gd)

    w_flat = weight.reshape(-1).astype(jnp.float32)
    if g == 1:
        w_seg = w_flat.reshape(1, D)
    else:  # block-diagonal weight: w_seg[j, j*D + d] = weight[d]
        w_seg = (jnp.eye(g, dtype=jnp.float32)[:, :, None]
                 * w_flat[None, None, :]).reshape(g, gd)
    bias_f32 = jnp.asarray(bias, dtype=jnp.float32).reshape(1)

    per_buf, limit_cap = _vmem_budget()
    tm = _pick_tile_rows(np_rows, gd, x.dtype, per_buf)
    num_tiles = pl.cdiv(np_rows, tm)

    vmem_bytes = (
        2 * tm * gd * itemsize                                              # x dbl buffer
        + (tm * gd * 4 if itemsize < 4 else 0)                              # f32 upcast temp
        + 2 * _round_up(g, _SUBLANE) * _round_up(gd, _LANE) * 4             # resident weight
        + 2 * _round_up(g, _SUBLANE) * _round_up(tm, _LANE) * out_itemsize  # out dbl buffer
        + _round_up(g, _SUBLANE) * _round_up(tm, _LANE) * 4                 # z temp
        + (2 << 20)                                                         # headroom
    )
    vmem_limit = int(min(max(vmem_bytes, 16 << 20), limit_cap))

    cost = pl.CostEstimate(
        flops=2 * N * D + 4 * N,
        transcendentals=N,                                                  # sigmoid -> exp
        bytes_accessed=N * D * itemsize + N * out_itemsize + g * gd * 4 + 4,
    )

    out = pl.pallas_call(
        _frame_scoring_kernel,
        out_shape=jax.ShapeDtypeStruct((num_tiles, g, tm), out_dtype),
        grid_spec=pltpu.PrefetchScalarGridSpec(
            num_scalar_prefetch=0,
            grid=(num_tiles,),
            in_specs=[
                pl.BlockSpec(memory_space=pltpu.SMEM),            # bias scalar
                pl.BlockSpec((tm, gd), lambda i: (i, 0)),         # packed x row tile
                pl.BlockSpec((g, gd), lambda i: (0, 0)),          # weight, resident
            ],
            out_specs=pl.BlockSpec((None, g, tm), lambda i: (i, 0, 0)),
        ),
        compiler_params=pltpu.CompilerParams(
            dimension_semantics=("parallel",),
            vmem_limit_bytes=vmem_limit,
        ),
        cost_estimate=cost,
    )(bias_f32, xp, w_seg)

    # out[t, j, p] = score of padded row (t*tm + p)*g + j  -> restore order, drop padding.
    scores = jnp.swapaxes(out, 1, 2).reshape(-1)[:N]
    return scores.reshape(B, S, 1)


if __name__ == "__main__":
    # Small shapes implied by the module: (batch, seq, input_dim).
    B, S, D = 2, 8, 32
    key = jax.random.PRNGKey(0)
    kx, kw, kb = jax.random.split(key, 3)
    x = jax.random.normal(kx, (B, S, D), dtype=jnp.float32)
    bound = 1.0 / float(D) ** 0.5
    weight = jax.random.uniform(kw, (1, D), minval=-bound, maxval=bound,
                                dtype=jnp.float32)
    bias = jax.random.uniform(kb, (1,), minval=-bound, maxval=bound,
                              dtype=jnp.float32)

    scores = jax.block_until_ready(frame_scoring(x, weight, bias))
    ref = jax.nn.sigmoid(jnp.einsum("bsd,od->bso", x, weight) + bias)
    assert scores.shape == (B, S, 1)
    assert scores.dtype == x.dtype
    assert jnp.allclose(scores, ref, atol=3e-3), "f32 packed path mismatch"

    # bf16 input, ragged row count, awkward D=96 (exercises packing + tail padding).
    B2, S2, D2 = 3, 37, 96
    x2 = jax.random.normal(jax.random.PRNGKey(1), (B2, S2, D2),
                           dtype=jnp.float32).astype(jnp.bfloat16)
    w2 = jax.random.uniform(jax.random.PRNGKey(2), (1, D2),
                            minval=-0.1, maxval=0.1, dtype=jnp.float32)
    b2 = jnp.asarray([0.05], dtype=jnp.float32)
    scores2 = jax.block_until_ready(frame_scoring(x2, w2, b2))
    ref2 = jax.nn.sigmoid(jnp.einsum("bsd,od->bso", x2.astype(jnp.float32), w2) + b2)
    assert scores2.shape == (B2, S2, 1)
    assert scores2.dtype == jnp.bfloat16
    assert jnp.allclose(scores2.astype(jnp.float32), ref2, atol=1.5e-2), \
        "bf16 ragged path mismatch"

    # f32, D >= 128 (unpacked path) and enough rows for a multi-tile grid (>=2 tiles).
    B3, S3, D3 = 4, 1024, 256
    x3 = jax.random.normal(jax.random.PRNGKey(3), (B3, S3, D3), dtype=jnp.float32)
    w3 = jax.random.uniform(jax.random.PRNGKey(4), (1, D3), minval=-0.05, maxval=0.05,
                            dtype=jnp.float32)
    b3 = jnp.asarray([-0.1], dtype=jnp.float32)
    scores3 = jax.block_until_ready(frame_scoring(x3, w3, b3))
    ref3 = jax.nn.sigmoid(jnp.einsum("bsd,od->bso", x3, w3) + b3)
    assert jnp.allclose(scores3, ref3, atol=3e-3), "f32 multi-tile path mismatch"

    print("KERNEL_OK")
</pallas_src>

<mosaic_0001>
module attributes {stable_mosaic.version = 11 : i64} {
  func.func @_frame_scoring_kernel(%arg0: i32, %arg1: memref<1xf32, #tpu.memory_space<smem>>, %arg2: memref<8x64xf32, #tpu.memory_space<vmem>>, %arg3: memref<2x64xf32, #tpu.memory_space<vmem>>, %arg4: memref<1x2x8xf32, #tpu.memory_space<vmem>>) attributes {dimension_semantics = [#tpu.dimension_semantics<parallel>], iteration_bounds = array<i64: 1>, scalar_prefetch = 0 : i64, scratch_operands = 0 : i64, tpu.core_type = #tpu.core_type<tc>, window_params = [{transform_indices = @transform_0, window_bounds = array<i64: 1>}, {transform_indices = @transform_1, window_bounds = array<i64: 8, 64>}, {pipeline_mode = #tpu.pipeline_mode<synchronous>, transform_indices = @transform_2, window_bounds = array<i64: 2, 64>}, {transform_indices = @transform_3, window_bounds = array<i64: 1, 2, 8>}]} {
    %c0 = arith.constant 0 : index
    %c0_0 = arith.constant 0 : index
    %0 = vector.load %arg2[%c0, %c0_0] : memref<8x64xf32, #tpu.memory_space<vmem>>, vector<8x64xf32>
    %c0_1 = arith.constant 0 : index
    %c0_2 = arith.constant 0 : index
    %1 = vector.load %arg3[%c0_1, %c0_2] : memref<2x64xf32, #tpu.memory_space<vmem>>, vector<2x64xf32>
    %cst = arith.constant dense<0.000000e+00> : vector<2x8xf32>
    %2 = tpu.matmul %1, %0, %cst {dimension_numbers = #tpu.dot_dimension_numbers<[1], [1], [0], [0], [0, 0, 1, 0], [], []>} : vector<2x64xf32>, vector<8x64xf32>, vector<2x8xf32> -> vector<2x8xf32>
    %c0_3 = arith.constant 0 : index
    %3 = memref.load %arg1[%c0_3] : memref<1xf32, #tpu.memory_space<smem>>
    %4 = vector.broadcast %3 : f32 to vector<2x8xf32>
    %5 = arith.addf %2, %4 : vector<2x8xf32>
    %6 = arith.negf %5 : vector<2x8xf32>
    %7 = math.exp %6 : vector<2x8xf32>
    %cst_4 = arith.constant 1.000000e+00 : f32
    %8 = vector.broadcast %cst_4 : f32 to vector<2x8xf32>
    %9 = arith.addf %8, %7 : vector<2x8xf32>
    %10 = arith.divf %8, %9 : vector<2x8xf32>
    %c0_5 = arith.constant 0 : index
    %c0_6 = arith.constant 0 : index
    %c0_7 = arith.constant 0 : index
    %11 = vector.load %arg4[%c0_5, %c0_6, %c0_7] : memref<1x2x8xf32, #tpu.memory_space<vmem>>, vector<1x2x8xf32>
    %12 = vector.shape_cast %11 : vector<1x2x8xf32> to vector<2x8xf32>
    %13 = vector.shape_cast %10 : vector<2x8xf32> to vector<1x2x8xf32>
    tpu.vector_store %arg4[%c0_5, %c0_6, %c0_7], %13 {strides = array<i32>} : memref<1x2x8xf32, #tpu.memory_space<vmem>>, vector<1x2x8xf32>,
    return
  }
  func.func @transform_0(%arg0: i32) -> i32 {
    %c0_i32 = arith.constant 0 : i32
    %c0_i32_0 = arith.constant 0 : i32
    return %c0_i32 : i32
  }
  func.func @transform_1(%arg0: i32) -> (i32, i32) {
    %c0_i32 = arith.constant 0 : i32
    %c0_i32_0 = arith.constant 0 : i32
    return %arg0, %c0_i32 : i32, i32
  }
  func.func @transform_2(%arg0: i32) -> (i32, i32) {
    %c0_i32 = arith.constant 0 : i32
    %c0_i32_0 = arith.constant 0 : i32
    %c0_i32_1 = arith.constant 0 : i32
    return %c0_i32, %c0_i32_0 : i32, i32
  }
  func.func @transform_3(%arg0: i32) -> (i32, i32, i32) {
    %c0_i32 = arith.constant 0 : i32
    %c0_i32_0 = arith.constant 0 : i32
    %c0_i32_1 = arith.constant 0 : i32
    return %arg0, %c0_i32, %c0_i32_0 : i32, i32, i32
  }
}

</mosaic_0001>

<llo_original>
// kernel: tpu_custom_call.1
$region0: #{tpu_custom_call.1}
  #allocation0 [shape = 'u32[]', space=smem, size = 0x4, offset = 0x4, fixed_abs, tag = 'smem constant byte address 0x4 - core index']
  #allocation1 [shape = 'u32[144,128]{1,0:T(1,128)}', space=vmem, size = 0x12000, scoped, tag = 'internal scratch']
  #allocation2 [shape = 'f32[1]{0:T(128)S(6)}', space=smem, size = 0x200, scoped, tag = 'scoped memory for tpu_custom_call.1']
  %s0 = inlined_call_operand.<no memory space> [shape: f32[1], index: 0, kind: input, shape index: {}]
  %s1 = inlined_call_operand.hbm [shape: f32[8,64], index: 1, kind: input, shape index: {}]
  %s2 = inlined_call_operand.vmem [shape: f32[2,64], index: 2, kind: input, shape index: {}]
  %s3 = inlined_call_operand.hbm [shape: f32[1,2,8], index: 3, kind: output, shape index: {}]
  %s4 = sld [smem:[#allocation0]]
  $region26: #{tpu_custom_call.1} parent=0
    _
  %s6 = ssub.s32 1, %s4
  %s7 = scalar_select 0, %s6, %s4
  %8 = sst [smem:[#allocation2]] %s0
  $region1: #{tpu_custom_call.1} parent=0
    #allocation3 [shape = 'u8[4096]{0}', space=vmem, size = 0x1000, scoped, tag = 'input window, operand 1, single buffered']
    #allocation4 [shape = 's32[1]{0}', space=sflag, size = 0x4, scoped, tag = 'scoped memory for tpu_custom_call.1']
    #allocation5 [shape = 's32[1]{0}', space=sflag, size = 0x4, scoped, tag = 'scoped memory for tpu_custom_call.1']
    #allocation6 [shape = 'u8[1024]{0}', space=vmem, size = 0x400, scoped, tag = 'output window, operand 0, single buffered']
    %9 = vsyncpa [#allocation4], 0
    %10 = vsyncpa [#allocation5], 0
    // Predicated region
    $region2: #{tpu_custom_call.1} parent=1 // pred_check
      _
    $region3: #{tpu_custom_call.1} parent=1 // pred_check_branch
      %12 = sbr.rel (0) target = $region5
    $region4: #{tpu_custom_call.1} parent=1 // pred_region
      _
    $region5: #{tpu_custom_call.1} parent=1 // pred_fallthru
      _
    // Predicated region
    $region6: #{tpu_custom_call.1} parent=1 // pred_check
      _
    $region7: #{tpu_custom_call.1} parent=1 // pred_check_branch
      %14 = sbr.rel (0) target = $region9
    $region8: #{tpu_custom_call.1} parent=1 // pred_region
      %s16 = ssub.s32 128, 128
      %17 = vsyncadd [#allocation4], %s16
      %s19 = sshll.u32 [#allocation3], 4
      %s20 = int_to_ptr.vmem [resolvable:$true] %s19
      %22 = dma.hbm_to_vmem [thread:$0]  %s1, 128, %s20, [#allocation4]
    $region9: #{tpu_custom_call.1} parent=1 // pred_fallthru
      _
    // Predicated region
    $region10: #{tpu_custom_call.1} parent=1 // pred_check
      _
    $region11: #{tpu_custom_call.1} parent=1 // pred_check_branch
      %24 = sbr.rel (0) target = $region13
    $region12: #{tpu_custom_call.1} parent=1 // pred_region
      _
    $region13: #{tpu_custom_call.1} parent=1 // pred_fallthru
      _
    // Predicated region
    $region14: #{tpu_custom_call.1} parent=1 // pred_check
      _
    $region15: #{tpu_custom_call.1} parent=1 // pred_check_branch
      %26 = sbr.rel (0) target = $region17
    $region16: #{tpu_custom_call.1} parent=1 // pred_region
      %27 = dma.done [#allocation4], 128
    $region17: #{tpu_custom_call.1} parent=1 // pred_fallthru
      _
    %v28 = vld [vmem:[#allocation3] sm:$0xff]
    %v29 = vld [vmem:[%s2] sm:$0x3]
    %s30 = sld [smem:[#allocation2]]
    %v31 = vstv %s30
    %vm32 = vcmask 523264
    %v34 = vsel %vm32, %v29, 0
    %v37 = vsel %vm32, %v28, 0
    %39 = vmatprep.subr.mxu0 0.0
    %40 = vmatpush1.xpose.msra.mxu0 %v37
    %41 = vmatprep.subr.mxu0 0.0
    %42 = vmatpush1.xpose.msra.mxu0 0.0
    %43 = vmatprep.subr.mxu0 0.0
    %44 = vmatpush1.xpose.msra.mxu0 0.0
    %45 = vmatprep.subr.mxu0 0.0
    %46 = vmatpush1.xpose.msra.mxu0 0.0
    %47 = vmatprep.subr.mxu0 0.0
    %48 = vmatpush1.xpose.msra.mxu0 0.0
    %49 = vmatprep.subr.mxu0 0.0
    %50 = vmatpush1.xpose.msra.mxu0 0.0
    %51 = vmatprep.subr.mxu0 0.0
    %52 = vmatpush1.xpose.msra.mxu0 0.0
    %53 = vmatprep.subr.mxu0 0.0
    %54 = vmatpush1.xpose.msra.mxu0 0.0
    %55 = vmatprep.subr.mxu0 0.0
    %56 = vmatpush1.xpose.msra.mxu0 0.0
    %57 = vmatprep.subr.mxu0 0.0
    %58 = vmatpush1.xpose.msra.mxu0 0.0
    %59 = vmatprep.subr.mxu0 0.0
    %60 = vmatpush1.xpose.msra.mxu0 0.0
    %61 = vmatprep.subr.mxu0 0.0
    %62 = vmatpush1.xpose.msra.mxu0 0.0
    %63 = vmatprep.subr.mxu0 0.0
    %64 = vmatpush1.xpose.msra.mxu0 0.0
    %65 = vmatprep.subr.mxu0 0.0
    %66 = vmatpush1.xpose.msra.mxu0 0.0
    %67 = vmatprep.subr.mxu0 0.0
    %68 = vmatpush1.xpose.msra.mxu0 0.0
    %69 = vmatprep.subr.mxu0 0.0
    %70 = vmatpush1.xpose.msra.mxu0 0.0
    %71 = vmatprep.subr.mxu0 0.0
    %72 = vmatpush1.xpose.msra.mxu0 0.0
    %73 = vmatprep.subr.mxu0 0.0
    %74 = vmatpush1.xpose.msra.mxu0 0.0
    %75 = vmatprep.subr.mxu0 0.0
    %76 = vmatpush1.xpose.msra.mxu0 0.0
    %77 = vmatprep.subr.mxu0 0.0
    %78 = vmatpush1.xpose.msra.mxu0 0.0
    %79 = vmatprep.subr.mxu0 0.0
    %80 = vmatpush1.xpose.msra.mxu0 0.0
    %81 = vmatprep.subr.mxu0 0.0
    %82 = vmatpush1.xpose.msra.mxu0 0.0
    %83 = vmatprep.subr.mxu0 0.0
    %84 = vmatpush1.xpose.msra.mxu0 0.0
    %85 = vmatprep.subr.mxu0 0.0
    %86 = vmatpush1.xpose.msra.mxu0 0.0
    %87 = vmatprep.subr.mxu0 0.0
    %88 = vmatpush1.xpose.msra.mxu0 0.0
    %89 = vmatprep.subr.mxu0 0.0
    %90 = vmatpush1.xpose.msra.mxu0 0.0
    %91 = vmatprep.subr.mxu0 0.0
    %92 = vmatpush1.xpose.msra.mxu0 0.0
    %93 = vmatprep.subr.mxu0 0.0
    %94 = vmatpush1.xpose.msra.mxu0 0.0
    %95 = vmatprep.subr.mxu0 0.0
    %96 = vmatpush1.xpose.msra.mxu0 0.0
    %97 = vmatprep.subr.mxu0 0.0
    %98 = vmatpush1.xpose.msra.mxu0 0.0
    %99 = vmatprep.subr.mxu0 0.0
    %100 = vmatpush1.xpose.msra.mxu0 0.0
    %101 = vmatprep.subr.mxu0 0.0
    %102 = vmatpush1.xpose.msra.mxu0 0.0
    %103 = vmatprep.mubr.f32.mxu0 0.0
    %104 = vmatmul.mubr.f32.gmra.mrb[0].mxu0 %v34
    %v105 = vpop.f32.mrb[0].mxu0
    %v106 = vadd.f32 %v31, %v105
    %v107 = vpop.f32.mrb[0].mxu0
    %108 = vdwg.mxu0
    %v109 = vxor.u32 %v106, 2147483648
    %v110 = vmul.f32 %v109, 1.442695
    %v111 = vpow.pop %v110
    %v112 = vadd.f32 %v111, 1.0
    %v113 = vrcp.pop %v112
    %v114 = vmul.f32 1.0, %v113
    %vm115 = vcmask 58368
    %116 = vst.msk [vmem:[#allocation6] sm:$0x3] %vm115, %v114
    // Predicated region
    $region18: #{tpu_custom_call.1} parent=1 // pred_check
      _
    $region19: #{tpu_custom_call.1} parent=1 // pred_check_branch
      %118 = sbr.rel (0) target = $region21
    $region20: #{tpu_custom_call.1} parent=1 // pred_region
      %s120 = ssub.s32 32, 32
      %121 = vsyncadd [#allocation5], %s120
      %s123 = sshll.u32 [#allocation6], 4
      %s124 = int_to_ptr.vmem [resolvable:$true] %s123
      %126 = dma.vmem_to_hbm [thread:$0]  %s124, 32, %s3, [#allocation5]
    $region21: #{tpu_custom_call.1} parent=1 // pred_fallthru
      _
    // Predicated region
    $region22: #{tpu_custom_call.1} parent=1 // pred_check
      _
    $region23: #{tpu_custom_call.1} parent=1 // pred_check_branch
      %128 = sbr.rel (0) target = $region25
    $region24: #{tpu_custom_call.1} parent=1 // pred_region
      %129 = dma.done [#allocation5], 32
    $region25: #{tpu_custom_call.1} parent=1 // pred_fallthru
      _
    %130 = vsyncpa [#allocation4], 1
    %131 = vsyncpa [#allocation5], 1

</llo_original>
